<compile_context>
chip_gen: v6e
topology: v6e:2x2x1
jax: 0.10.0
libtpu: 0.0.40
codegen_flags: <defaults>
</compile_context>

<pallas_src>
import jax
import jax.numpy as jnp
from jax.experimental import pallas as pl
from jax.experimental.pallas import tpu as pltpu

ALPHA = 0.2                  # leaky-relu slope (only needed by the reference)
NEG_BIG = -9.0e15            # matches -9000000000000000.0 in the torch code

_TARGET_TILE_BYTES = 2 << 20   # ~2 MiB output tile per grid step
_MAX_TILE_BYTES = 8 << 20      # => <=16 MiB double-buffered output in VMEM
_VMEM_LIMIT_BYTES = 32 << 20   # explicit scoped-VMEM limit (safe on v5e/v6e/v7x)


def _attention_softmax_kernel(f1_ref, fb_ref, f2_ref, q_ref, valid_ref, att_ref):
    # f1_ref   : (TM, 1)  per-row scores  h_i · a[:F]   (this row tile)
    # fb_ref   : (TM, 1)  1.0 if the row is fully masked (all e<=0), else 0.0
    # f2_ref   : (1,  Mp) per-column scores h_j · a[F:]  (lane-dense, padded NEG)
    # q_ref    : (1,  Mp) exp(f2_j - f2max); 0 for padded columns
    # valid_ref: (1,  Mp) 1.0 for real columns, 0.0 for padding
    # att_ref  : (TM, Mp) output attention rows
    e = f1_ref[...] + f2_ref[...]                        # broadcast add -> (TM, Mp)

    # Unmasked entries contribute the precomputed exp(f2_j - f2max); masked
    # entries contribute 0, except on fully-masked rows where the reference
    # degenerates to a uniform 1/M row (fb * valid reproduces that).
    p = jnp.where(e > 0.0, q_ref[...], fb_ref[...] * valid_ref[...])

    s = jnp.sum(p, axis=1, keepdims=True)                # row sums (padding adds 0)
    att_ref[...] = (p * pl.reciprocal(s, approx=False)).astype(att_ref.dtype)


def _choose_block_rows(m_pad, out_itemsize):
    """Row tile: ~2 MiB (<=8 MiB) of output per step, multiple of 8, and a
    divisor of m_pad so every block is full-extent (unmasked stores)."""
    row_bytes = m_pad * out_itemsize
    budget = min(_TARGET_TILE_BYTES, _MAX_TILE_BYTES)
    tm = max(8, min(m_pad, budget // row_bytes))
    tm = max(8, (tm // 8) * 8)
    while m_pad % tm:            # m_pad is a multiple of 128, terminates at <=8
        tm -= 8
    return tm


def attention_block_forward(x, W, a, *, out_dtype=jnp.float32):
    """x: (1, C, T, V) f32; W: (C, F); a: (2F, 1). Returns (T*V, T*V) attention.

    out_dtype=jnp.bfloat16 halves the HBM writeback if the consumer tolerates it.
    """
    N, C, T, V = x.shape
    assert N == 1, "module's view(T*V, C) implies batch size 1"
    F = W.shape[1]
    M = T * V
    Mp = ((M + 127) // 128) * 128          # pad rows/cols to a lane-dense multiple

    # glue: NCHW -> (M, C), t-major / v-minor row order (torch permute+view)
    x_flat = jnp.transpose(x, (0, 2, 3, 1)).reshape(M, C).astype(jnp.float32)

    # Tiny projections stay in XLA (same association as torch's h = x@W path,
    # so the e>0 mask decision matches the module's bit-for-bit).
    h = x_flat @ W.astype(jnp.float32)                            # (M, F)
    f1 = h @ a[:F, :].astype(jnp.float32)                         # (M, 1)
    f2 = (h @ a[F:, :].astype(jnp.float32)).reshape(M)            # (M,)
    f2max = jnp.max(f2)                                           # scalar

    # Column-side rows (lane-dense, padded entries behave as masked columns).
    f2_row = jnp.full((1, Mp), NEG_BIG, jnp.float32).at[0, :M].set(f2)
    q_row = jnp.exp(f2_row - f2max)                               # padded -> 0
    valid_row = (jnp.arange(Mp, dtype=jnp.int32) < M).astype(jnp.float32)[None, :]

    # Row-side columns.  fb = 1 for rows with every e<=0 (and for padded rows,
    # which are sliced off anyway) so those rows come out uniform like torch.
    f1_col = jnp.zeros((Mp, 1), jnp.float32).at[:M, :].set(f1)
    row_all_masked = ((f1 + f2max) <= 0.0).astype(jnp.float32)    # (M, 1)
    fb_col = jnp.ones((Mp, 1), jnp.float32).at[:M, :].set(row_all_masked)

    out_itemsize = jnp.dtype(out_dtype).itemsize
    tm = _choose_block_rows(Mp, out_itemsize)
    grid = (Mp // tm,)

    cost = pl.CostEstimate(
        flops=6 * Mp * Mp,                      # add/cmp/sel/mul/sum/normalize
        transcendentals=0,                      # exp factored into the wrapper
        bytes_accessed=Mp * Mp * out_itemsize + grid[0] * 3 * Mp * 4 + 2 * Mp * 4,
    )

    att = pl.pallas_call(
        _attention_softmax_kernel,
        out_shape=jax.ShapeDtypeStruct((Mp, Mp), out_dtype),
        grid=grid,
        in_specs=[
            pl.BlockSpec((tm, 1), lambda i: (i, 0)),    # f1 tile for these rows
            pl.BlockSpec((tm, 1), lambda i: (i, 0)),    # fully-masked-row flags
            pl.BlockSpec((1, Mp), lambda i: (0, 0)),    # f2 row (full, lane-dense)
            pl.BlockSpec((1, Mp), lambda i: (0, 0)),    # precomputed exp row
            pl.BlockSpec((1, Mp), lambda i: (0, 0)),    # column validity row
        ],
        out_specs=pl.BlockSpec((tm, Mp), lambda i: (i, 0)),
        compiler_params=pltpu.CompilerParams(
            dimension_semantics=("parallel",),          # rows shard across TCs
            vmem_limit_bytes=_VMEM_LIMIT_BYTES,
        ),
        cost_estimate=cost,
    )(f1_col, fb_col, f2_row, q_row, valid_row)

    if Mp != M:
        att = att[:M, :M]
    return att


def _reference_forward(x, W, a):
    """Pure-JAX mirror of the torch forward (incl. the redundant LeakyReLU)."""
    N, C, T, V = x.shape
    F = W.shape[1]
    xf = jnp.transpose(x, (0, 2, 3, 1)).reshape(T * V, C)
    h = xf @ W
    # torch's cat([h.repeat(1,V).view(V*V,-1), h.repeat(V,1)],1) @ a is exactly
    # h@a[:F] broadcast-added with (h@a[F:])^T.
    e = h @ a[:F, :] + (h @ a[F:, :]).T
    e = jnp.where(e > 0, e, ALPHA * e)                  # LeakyReLU(alpha)
    logits = jnp.where(e > 0, e, NEG_BIG)
    return jax.nn.softmax(logits, axis=1)


if __name__ == "__main__":
    key = jax.random.PRNGKey(0)
    kx, kw, ka, kx2 = jax.random.split(key, 4)

    in_channels, atten_hidden = 16, 32
    T, V = 16, 16                     # M = T*V = 256 nodes -> one (256, 256) tile

    x = jax.random.normal(kx, (1, in_channels, T, V), dtype=jnp.float32)
    # deterministic parameter init: normal(mean=0, std=0.01) like nn.init.normal_
    W = 0.01 * jax.random.normal(kw, (in_channels, atten_hidden), dtype=jnp.float32)
    a = 0.01 * jax.random.normal(ka, (2 * atten_hidden, 1), dtype=jnp.float32)

    out = jax.block_until_ready(attention_block_forward(x, W, a))
    ref = _reference_forward(x, W, a)
    M = T * V
    assert out.shape == (M, M)
    assert jnp.allclose(out, ref, atol=1e-5, rtol=1e-3), float(
        jnp.max(jnp.abs(out - ref)))

    # Ragged node count exercises the pad-to-128 / slice-back path (M=120).
    T2, V2 = 6, 20
    x2 = jax.random.normal(kx2, (1, in_channels, T2, V2), dtype=jnp.float32)
    out2 = jax.block_until_ready(attention_block_forward(x2, W, a))
    ref2 = _reference_forward(x2, W, a)
    M2 = T2 * V2
    assert out2.shape == (M2, M2)
    assert jnp.allclose(out2, ref2, atol=1e-5, rtol=1e-3), float(
        jnp.max(jnp.abs(out2 - ref2)))

    print("KERNEL_OK")
</pallas_src>

<mosaic_0001>
module attributes {stable_mosaic.version = 11 : i64} {
  func.func @_attention_softmax_kernel(%arg0: i32, %arg1: memref<256x1xf32, #tpu.memory_space<vmem>>, %arg2: memref<256x1xf32, #tpu.memory_space<vmem>>, %arg3: memref<1x256xf32, #tpu.memory_space<vmem>>, %arg4: memref<1x256xf32, #tpu.memory_space<vmem>>, %arg5: memref<1x256xf32, #tpu.memory_space<vmem>>, %arg6: memref<256x256xf32, #tpu.memory_space<vmem>>) attributes {dimension_semantics = [#tpu.dimension_semantics<parallel>], iteration_bounds = array<i64: 1>, scalar_prefetch = 0 : i64, scratch_operands = 0 : i64, tpu.core_type = #tpu.core_type<tc>, window_params = [{transform_indices = @transform_0, window_bounds = array<i64: 256, 1>}, {transform_indices = @transform_1, window_bounds = array<i64: 256, 1>}, {pipeline_mode = #tpu.pipeline_mode<synchronous>, transform_indices = @transform_2, window_bounds = array<i64: 1, 256>}, {pipeline_mode = #tpu.pipeline_mode<synchronous>, transform_indices = @transform_3, window_bounds = array<i64: 1, 256>}, {pipeline_mode = #tpu.pipeline_mode<synchronous>, transform_indices = @transform_4, window_bounds = array<i64: 1, 256>}, {transform_indices = @transform_5, window_bounds = array<i64: 256, 256>}]} {
    %c0 = arith.constant 0 : index
    %c0_0 = arith.constant 0 : index
    %0 = vector.load %arg1[%c0, %c0_0] : memref<256x1xf32, #tpu.memory_space<vmem>>, vector<256x1xf32>
    %c0_1 = arith.constant 0 : index
    %c0_2 = arith.constant 0 : index
    %1 = vector.load %arg3[%c0_1, %c0_2] : memref<1x256xf32, #tpu.memory_space<vmem>>, vector<1x256xf32>
    %2 = vector.broadcast %0 : vector<256x1xf32> to vector<256x256xf32>
    %3 = vector.broadcast %1 : vector<1x256xf32> to vector<256x256xf32>
    %4 = arith.addf %2, %3 : vector<256x256xf32>
    %cst = arith.constant 0.000000e+00 : f32
    %5 = vector.broadcast %cst : f32 to vector<256x256xf32>
    %6 = arith.cmpf ogt, %4, %5 : vector<256x256xf32>
    %c0_3 = arith.constant 0 : index
    %c0_4 = arith.constant 0 : index
    %7 = vector.load %arg4[%c0_3, %c0_4] : memref<1x256xf32, #tpu.memory_space<vmem>>, vector<1x256xf32>
    %c0_5 = arith.constant 0 : index
    %c0_6 = arith.constant 0 : index
    %8 = vector.load %arg2[%c0_5, %c0_6] : memref<256x1xf32, #tpu.memory_space<vmem>>, vector<256x1xf32>
    %c0_7 = arith.constant 0 : index
    %c0_8 = arith.constant 0 : index
    %9 = vector.load %arg5[%c0_7, %c0_8] : memref<1x256xf32, #tpu.memory_space<vmem>>, vector<1x256xf32>
    %10 = vector.broadcast %8 : vector<256x1xf32> to vector<256x256xf32>
    %11 = vector.broadcast %9 : vector<1x256xf32> to vector<256x256xf32>
    %12 = arith.mulf %10, %11 : vector<256x256xf32>
    %13 = vector.shape_cast %7 : vector<1x256xf32> to vector<1x256xf32>
    %14 = vector.broadcast %13 : vector<1x256xf32> to vector<256x256xf32>
    %15 = arith.select %6, %14, %12 : vector<256x256xi1>, vector<256x256xf32>
    %cst_9 = arith.constant dense<0.000000e+00> : vector<256xf32>
    %16 = vector.multi_reduction <add>, %15, %cst_9 [1] : vector<256x256xf32> to vector<256xf32>
    %17 = vector.shape_cast %16 : vector<256xf32> to vector<256x1xf32>
    %18 = tpu.reciprocal %17 : vector<256x1xf32> -> vector<256x1xf32>
    %19 = vector.broadcast %18 : vector<256x1xf32> to vector<256x256xf32>
    %20 = arith.mulf %15, %19 : vector<256x256xf32>
    %c0_10 = arith.constant 0 : index
    %c0_11 = arith.constant 0 : index
    %21 = vector.load %arg6[%c0_10, %c0_11] : memref<256x256xf32, #tpu.memory_space<vmem>>, vector<256x256xf32>
    tpu.vector_store %arg6[%c0_10, %c0_11], %20 {strides = array<i32>} : memref<256x256xf32, #tpu.memory_space<vmem>>, vector<256x256xf32>,
    return
  }
  func.func @transform_0(%arg0: i32) -> (i32, i32) {
    %c0_i32 = arith.constant 0 : i32
    %c0_i32_0 = arith.constant 0 : i32
    return %arg0, %c0_i32 : i32, i32
  }
  func.func @transform_1(%arg0: i32) -> (i32, i32) {
    %c0_i32 = arith.constant 0 : i32
    %c0_i32_0 = arith.constant 0 : i32
    return %arg0, %c0_i32 : i32, i32
  }
  func.func @transform_2(%arg0: i32) -> (i32, i32) {
    %c0_i32 = arith.constant 0 : i32
    %c0_i32_0 = arith.constant 0 : i32
    %c0_i32_1 = arith.constant 0 : i32
    return %c0_i32, %c0_i32_0 : i32, i32
  }
  func.func @transform_3(%arg0: i32) -> (i32, i32) {
    %c0_i32 = arith.constant 0 : i32
    %c0_i32_0 = arith.constant 0 : i32
    %c0_i32_1 = arith.constant 0 : i32
    return %c0_i32, %c0_i32_0 : i32, i32
  }
  func.func @transform_4(%arg0: i32) -> (i32, i32) {
    %c0_i32 = arith.constant 0 : i32
    %c0_i32_0 = arith.constant 0 : i32
    %c0_i32_1 = arith.constant 0 : i32
    return %c0_i32, %c0_i32_0 : i32, i32
  }
  func.func @transform_5(%arg0: i32) -> (i32, i32) {
    %c0_i32 = arith.constant 0 : i32
    %c0_i32_0 = arith.constant 0 : i32
    return %arg0, %c0_i32 : i32, i32
  }
}

</mosaic_0001>

<llo_original>
// kernel: tpu_custom_call.1
$region0: #{tpu_custom_call.1}
  #allocation0 [shape = 'u32[]', space=smem, size = 0x4, offset = 0x4, fixed_abs, tag = 'smem constant byte address 0x4 - core index']
  #allocation1 [shape = 'u32[144,128]{1,0:T(1,128)}', space=vmem, size = 0x12000, scoped, tag = 'internal scratch']
  %s0 = inlined_call_operand.vmem [shape: f32[256,1], index: 0, kind: input, shape index: {}]
  %s1 = inlined_call_operand.vmem [shape: f32[256,1], index: 1, kind: input, shape index: {}]
  %s2 = inlined_call_operand.vmem [shape: f32[1,256], index: 2, kind: input, shape index: {}]
  %s3 = inlined_call_operand.vmem [shape: f32[1,256], index: 3, kind: input, shape index: {}]
  %s4 = inlined_call_operand.vmem [shape: f32[1,256], index: 4, kind: input, shape index: {}]
  %s5 = inlined_call_operand.hbm [shape: f32[256,256], index: 5, kind: output, shape index: {}]
  %s6 = sld [smem:[#allocation0]]
  $region30: #{tpu_custom_call.1} parent=0
    _
  %s8 = ssub.s32 1, %s6
  %s9 = scalar_select 0, %s8, %s6
  $region1: #{tpu_custom_call.1} parent=0
    #allocation2 [shape = 'u8[262144]{0}', space=vmem, size = 0x40000, scoped, tag = 'output window, operand 0, single buffered']
    #allocation3 [shape = 's32[1]{0}', space=sflag, size = 0x4, scoped, tag = 'scoped memory for tpu_custom_call.1']
    %10 = vsyncpa [#allocation3], 0
    // Predicated region
    $region2: #{tpu_custom_call.1} parent=1 // pred_check
      _
    $region3: #{tpu_custom_call.1} parent=1 // pred_check_branch
      %12 = sbr.rel (0) target = $region5
    $region4: #{tpu_custom_call.1} parent=1 // pred_region
      _
    $region5: #{tpu_custom_call.1} parent=1 // pred_fallthru
      _
    // Predicated region
    $region6: #{tpu_custom_call.1} parent=1 // pred_check
      _
    $region7: #{tpu_custom_call.1} parent=1 // pred_check_branch
      %14 = sbr.rel (0) target = $region9
    $region8: #{tpu_custom_call.1} parent=1 // pred_region
      _
    $region9: #{tpu_custom_call.1} parent=1 // pred_fallthru
      _
    // Predicated region
    $region10: #{tpu_custom_call.1} parent=1 // pred_check
      _
    $region11: #{tpu_custom_call.1} parent=1 // pred_check_branch
      %16 = sbr.rel (0) target = $region13
    $region12: #{tpu_custom_call.1} parent=1 // pred_region
      _
    $region13: #{tpu_custom_call.1} parent=1 // pred_fallthru
      _
    // Predicated region
    $region14: #{tpu_custom_call.1} parent=1 // pred_check
      _
    $region15: #{tpu_custom_call.1} parent=1 // pred_check_branch
      %18 = sbr.rel (0) target = $region17
    $region16: #{tpu_custom_call.1} parent=1 // pred_region
      _
    $region17: #{tpu_custom_call.1} parent=1 // pred_fallthru
      _
    // Predicated region
    $region18: #{tpu_custom_call.1} parent=1 // pred_check
      _
    $region19: #{tpu_custom_call.1} parent=1 // pred_check_branch
      %20 = sbr.rel (0) target = $region21
    $region20: #{tpu_custom_call.1} parent=1 // pred_region
      _
    $region21: #{tpu_custom_call.1} parent=1 // pred_fallthru
      _
    %v21 = vld [vmem:[%s0] sm:$0xff]
    %v22 = vld [vmem:[%s0 + $0x8] sm:$0xff]
    %v23 = vld [vmem:[%s0 + $0x10] sm:$0xff]
    %v24 = vld [vmem:[%s0 + $0x18] sm:$0xff]
    %v25 = vld [vmem:[%s0 + $0x20] sm:$0xff]
    %v26 = vld [vmem:[%s0 + $0x28] sm:$0xff]
    %v27 = vld [vmem:[%s0 + $0x30] sm:$0xff]
    %v28 = vld [vmem:[%s0 + $0x38] sm:$0xff]
    %v29 = vld [vmem:[%s0 + $0x40] sm:$0xff]
    %v30 = vld [vmem:[%s0 + $0x48] sm:$0xff]
    %v31 = vld [vmem:[%s0 + $0x50] sm:$0xff]
    %v32 = vld [vmem:[%s0 + $0x58] sm:$0xff]
    %v33 = vld [vmem:[%s0 + $0x60] sm:$0xff]
    %v34 = vld [vmem:[%s0 + $0x68] sm:$0xff]
    %v35 = vld [vmem:[%s0 + $0x70] sm:$0xff]
    %v36 = vld [vmem:[%s0 + $0x78] sm:$0xff]
    %v37 = vld [vmem:[%s0 + $0x80] sm:$0xff]
    %v38 = vld [vmem:[%s0 + $0x88] sm:$0xff]
    %v39 = vld [vmem:[%s0 + $0x90] sm:$0xff]
    %v40 = vld [vmem:[%s0 + $0x98] sm:$0xff]
    %v41 = vld [vmem:[%s0 + $0xa0] sm:$0xff]
    %v42 = vld [vmem:[%s0 + $0xa8] sm:$0xff]
    %v43 = vld [vmem:[%s0 + $0xb0] sm:$0xff]
    %v44 = vld [vmem:[%s0 + $0xb8] sm:$0xff]
    %v45 = vld [vmem:[%s0 + $0xc0] sm:$0xff]
    %v46 = vld [vmem:[%s0 + $0xc8] sm:$0xff]
    %v47 = vld [vmem:[%s0 + $0xd0] sm:$0xff]
    %v48 = vld [vmem:[%s0 + $0xd8] sm:$0xff]
    %v49 = vld [vmem:[%s0 + $0xe0] sm:$0xff]
    %v50 = vld [vmem:[%s0 + $0xe8] sm:$0xff]
    %v51 = vld [vmem:[%s0 + $0xf0] sm:$0xff]
    %v52 = vld [vmem:[%s0 + $0xf8] sm:$0xff]
    %v53 = vld [vmem:[%s2] sm:$0x3]
    %55 = vset.pattern.permute.xlu0 0
    %56 = vperm.xlu0 %55, %v21
    %v57 = vpop.permute.xlu0 %56
    %60 = vset.pattern.permute.xlu0 0
    %61 = vperm.xlu0 %60, %v22
    %v62 = vpop.permute.xlu0 %61
    %65 = vset.pattern.permute.xlu0 0
    %66 = vperm.xlu0 %65, %v23
    %v67 = vpop.permute.xlu0 %66
    %70 = vset.pattern.permute.xlu0 0
    %71 = vperm.xlu0 %70, %v24
    %v72 = vpop.permute.xlu0 %71
    %75 = vset.pattern.permute.xlu0 0
    %76 = vperm.xlu0 %75, %v25
    %v77 = vpop.permute.xlu0 %76
    %80 = vset.pattern.permute.xlu0 0
    %81 = vperm.xlu0 %80, %v26
    %v82 = vpop.permute.xlu0 %81
    %85 = vset.pattern.permute.xlu0 0
    %86 = vperm.xlu0 %85, %v27
    %v87 = vpop.permute.xlu0 %86
    %90 = vset.pattern.permute.xlu0 0
    %91 = vperm.xlu0 %90, %v28
    %v92 = vpop.permute.xlu0 %91
    %95 = vset.pattern.permute.xlu0 0
    %96 = vperm.xlu0 %95, %v29
    %v97 = vpop.permute.xlu0 %96
    %100 = vset.pattern.permute.xlu0 0
    %101 = vperm.xlu0 %100, %v30
    %v102 = vpop.permute.xlu0 %101
    %105 = vset.pattern.permute.xlu0 0
    %106 = vperm.xlu0 %105, %v31
    %v107 = vpop.permute.xlu0 %106
    %110 = vset.pattern.permute.xlu0 0
    %111 = vperm.xlu0 %110, %v32
    %v112 = vpop.permute.xlu0 %111
    %115 = vset.pattern.permute.xlu0 0
    %116 = vperm.xlu0 %115, %v33
    %v117 = vpop.permute.xlu0 %116
    %120 = vset.pattern.permute.xlu0 0
    %121 = vperm.xlu0 %120, %v34
    %v122 = vpop.permute.xlu0 %121
    %125 = vset.pattern.permute.xlu0 0
    %126 = vperm.xlu0 %125, %v35
    %v127 = vpop.permute.xlu0 %126
    %130 = vset.pattern.permute.xlu0 0
    %131 = vperm.xlu0 %130, %v36
    %v132 = vpop.permute.xlu0 %131
    %135 = vset.pattern.permute.xlu0 0
    %136 = vperm.xlu0 %135, %v37
    %v137 = vpop.permute.xlu0 %136
    %140 = vset.pattern.permute.xlu0 0
    %141 = vperm.xlu0 %140, %v38
    %v142 = vpop.permute.xlu0 %141
    %145 = vset.pattern.permute.xlu0 0
    %146 = vperm.xlu0 %145, %v39
    %v147 = vpop.permute.xlu0 %146
    %150 = vset.pattern.permute.xlu0 0
    %151 = vperm.xlu0 %150, %v40
    %v152 = vpop.permute.xlu0 %151
    %155 = vset.pattern.permute.xlu0 0
    %156 = vperm.xlu0 %155, %v41
    %v157 = vpop.permute.xlu0 %156
    %160 = vset.pattern.permute.xlu0 0
    %161 = vperm.xlu0 %160, %v42
    %v162 = vpop.permute.xlu0 %161
    %165 = vset.pattern.permute.xlu0 0
    %166 = vperm.xlu0 %165, %v43
    %v167 = vpop.permute.xlu0 %166
    %170 = vset.pattern.permute.xlu0 0
    %171 = vperm.xlu0 %170, %v44
    %v172 = vpop.permute.xlu0 %171
    %175 = vset.pattern.permute.xlu0 0
    %176 = vperm.xlu0 %175, %v45
    %v177 = vpop.permute.xlu0 %176
    %180 = vset.pattern.permute.xlu0 0
    %181 = vperm.xlu0 %180, %v46
    %v182 = vpop.permute.xlu0 %181
    %185 = vset.pattern.permute.xlu0 0
    %186 = vperm.xlu0 %185, %v47
    %v187 = vpop.permute.xlu0 %186
    %190 = vset.pattern.permute.xlu0 0
    %191 = vperm.xlu0 %190, %v48
    %v192 = vpop.permute.xlu0 %191
    %195 = vset.pattern.permute.xlu0 0
    %196 = vperm.xlu0 %195, %v49
    %v197 = vpop.permute.xlu0 %196
    %200 = vset.pattern.permute.xlu0 0
    %201 = vperm.xlu0 %200, %v50
    %v202 = vpop.permute.xlu0 %201
    %205 = vset.pattern.permute.xlu0 0
    %206 = vperm.xlu0 %205, %v51
    %v207 = vpop.permute.xlu0 %206
    %210 = vset.pattern.permute.xlu0 0
    %211 = vperm.xlu0 %210, %v52
    %v212 = vpop.permute.xlu0 %211
    %v215 = vlaneseq
    %v216 = vshrl.u32 %v215, 7
    %v217 = vsub.s32 0, %v216
    %v218 = vrot.slane %v53, %v217
    %v219 = vlaneseq
    %v220 = vshrl.u32 %v219, 7
    %v221 = vsub.s32 1, %v220
    %v222 = vrot.slane %v53, %v221
    %v225 = vadd.f32 %v57, %v218
    %v226 = vadd.f32 %v57, %v222
    %v227 = vadd.f32 %v62, %v218
    %v228 = vadd.f32 %v62, %v222
    %v229 = vadd.f32 %v67, %v218
    %v230 = vadd.f32 %v67, %v222
    %v231 = vadd.f32 %v72, %v218
    %v232 = vadd.f32 %v72, %v222
    %v233 = vadd.f32 %v77, %v218
    %v234 = vadd.f32 %v77, %v222
    %v235 = vadd.f32 %v82, %v218
    %v236 = vadd.f32 %v82, %v222
    %v237 = vadd.f32 %v87, %v218
    %v238 = vadd.f32 %v87, %v222
    %v239 = vadd.f32 %v92, %v218
    %v240 = vadd.f32 %v92, %v222
    %v241 = vadd.f32 %v97, %v218
    %v242 = vadd.f32 %v97, %v222
    %v243 = vadd.f32 %v102, %v218
    %v244 = vadd.f32 %v102, %v222
    %v245 = vadd.f32 %v107, %v218
    %v246 = vadd.f32 %v107, %v222
    %v247 = vadd.f32 %v112, %v218
    %v248 = vadd.f32 %v112, %v222
    %v249 = vadd.f32 %v117, %v218
    %v250 = vadd.f32 %v117, %v222
    %v251 = vadd.f32 %v122, %v218
    %v252 = vadd.f32 %v122, %v222
    %v253 = vadd.f32 %v127, %v218
    %v254 = vadd.f32 %v127, %v222
    %v255 = vadd.f32 %v132, %v218
    %v256 = vadd.f32 %v132, %v222
    %v257 = vadd.f32 %v137, %v218
    %v258 = vadd.f32 %v137, %v222
    %v259 = vadd.f32 %v142, %v218
    %v260 = vadd.f32 %v142, %v222
    %v261 = vadd.f32 %v147, %v218
    %v262 = vadd.f32 %v147, %v222
    %v263 = vadd.f32 %v152, %v218
    %v264 = vadd.f32 %v152, %v222
    %v265 = vadd.f32 %v157, %v218
    %v266 = vadd.f32 %v157, %v222
    %v267 = vadd.f32 %v162, %v218
    %v268 = vadd.f32 %v162, %v222
    %v269 = vadd.f32 %v167, %v218
    %v270 = vadd.f32 %v167, %v222
    %v271 = vadd.f32 %v172, %v218
    %v272 = vadd.f32 %v172, %v222
    %v273 = vadd.f32 %v177, %v218
    %v274 = vadd.f32 %v177, %v222
    %v275 = vadd.f32 %v182, %v218
    %v276 = vadd.f32 %v182, %v222
    %v277 = vadd.f32 %v187, %v218
    %v278 = vadd.f32 %v187, %v222
    %v279 = vadd.f32 %v192, %v218
    %v280 = vadd.f32 %v192, %v222
    %v281 = vadd.f32 %v197, %v218
    %v282 = vadd.f32 %v197, %v222
    %v283 = vadd.f32 %v202, %v218
    %v284 = vadd.f32 %v202, %v222
    %v285 = vadd.f32 %v207, %v218
    %v286 = vadd.f32 %v207, %v222
    %v287 = vadd.f32 %v212, %v218
    %v288 = vadd.f32 %v212, %v222
    %vm289 = vcmp.gt.f32.partialorder %v225, 0.0
    %vm290 = vcmp.gt.f32.partialorder %v226, 0.0
    %vm291 = vcmp.gt.f32.partialorder %v227, 0.0
    %vm292 = vcmp.gt.f32.partialorder %v228, 0.0
    %vm293 = vcmp.gt.f32.partialorder %v229, 0.0
    %vm294 = vcmp.gt.f32.partialorder %v230, 0.0
    %vm295 = vcmp.gt.f32.partialorder %v231, 0.0
    %vm296 = vcmp.gt.f32.partialorder %v232, 0.0
    %vm297 = vcmp.gt.f32.partialorder %v233, 0.0
    %vm298 = vcmp.gt.f32.partialorder %v234, 0.0
    %vm299 = vcmp.gt.f32.partialorder %v235, 0.0
    %vm300 = vcmp.gt.f32.partialorder %v236, 0.0
    %vm301 = vcmp.gt.f32.partialorder %v237, 0.0
    %vm302 = vcmp.gt.f32.partialorder %v238, 0.0
    %vm303 = vcmp.gt.f32.partialorder %v239, 0.0
    %vm304 = vcmp.gt.f32.partialorder %v240, 0.0
    %vm305 = vcmp.gt.f32.partialorder %v241, 0.0
    %vm306 = vcmp.gt.f32.partialorder %v242, 0.0
    %vm307 = vcmp.gt.f32.partialorder %v243, 0.0
    %vm308 = vcmp.gt.f32.partialorder %v244, 0.0
    %vm309 = vcmp.gt.f32.partialorder %v245, 0.0
    %vm310 = vcmp.gt.f32.partialorder %v246, 0.0
    %vm311 = vcmp.gt.f32.partialorder %v247, 0.0
    %vm312 = vcmp.gt.f32.partialorder %v248, 0.0
    %vm313 = vcmp.gt.f32.partialorder %v249, 0.0
    %vm314 = vcmp.gt.f32.partialorder %v250, 0.0
    %vm315 = vcmp.gt.f32.partialorder %v251, 0.0
    %vm316 = vcmp.gt.f32.partialorder %v252, 0.0
    %vm317 = vcmp.gt.f32.partialorder %v253, 0.0
    %vm318 = vcmp.gt.f32.partialorder %v254, 0.0
    %vm319 = vcmp.gt.f32.partialorder %v255, 0.0
    %vm320 = vcmp.gt.f32.partialorder %v256, 0.0
    %vm321 = vcmp.gt.f32.partialorder %v257, 0.0
    %vm322 = vcmp.gt.f32.partialorder %v258, 0.0
    %vm323 = vcmp.gt.f32.partialorder %v259, 0.0
    %vm324 = vcmp.gt.f32.partialorder %v260, 0.0
    %vm325 = vcmp.gt.f32.partialorder %v261, 0.0
    %vm326 = vcmp.gt.f32.partialorder %v262, 0.0
    %vm327 = vcmp.gt.f32.partialorder %v263, 0.0
    %vm328 = vcmp.gt.f32.partialorder %v264, 0.0
    %vm329 = vcmp.gt.f32.partialorder %v265, 0.0
    %vm330 = vcmp.gt.f32.partialorder %v266, 0.0
    %vm331 = vcmp.gt.f32.partialorder %v267, 0.0
    %vm332 = vcmp.gt.f32.partialorder %v268, 0.0
    %vm333 = vcmp.gt.f32.partialorder %v269, 0.0
    %vm334 = vcmp.gt.f32.partialorder %v270, 0.0
    %vm335 = vcmp.gt.f32.partialorder %v271, 0.0
    %vm336 = vcmp.gt.f32.partialorder %v272, 0.0
    %vm337 = vcmp.gt.f32.partialorder %v273, 0.0
    %vm338 = vcmp.gt.f32.partialorder %v274, 0.0
    %vm339 = vcmp.gt.f32.partialorder %v275, 0.0
    %vm340 = vcmp.gt.f32.partialorder %v276, 0.0
    %vm341 = vcmp.gt.f32.partialorder %v277, 0.0
    %vm342 = vcmp.gt.f32.partialorder %v278, 0.0
    %vm343 = vcmp.gt.f32.partialorder %v279, 0.0
    %vm344 = vcmp.gt.f32.partialorder %v280, 0.0
    %vm345 = vcmp.gt.f32.partialorder %v281, 0.0
    %vm346 = vcmp.gt.f32.partialorder %v282, 0.0
    %vm347 = vcmp.gt.f32.partialorder %v283, 0.0
    %vm348 = vcmp.gt.f32.partialorder %v284, 0.0
    %vm349 = vcmp.gt.f32.partialorder %v285, 0.0
    %vm350 = vcmp.gt.f32.partialorder %v286, 0.0
    %vm351 = vcmp.gt.f32.partialorder %v287, 0.0
    %vm352 = vcmp.gt.f32.partialorder %v288, 0.0
    %v353 = vld [vmem:[%s3] sm:$0x3]
    %v354 = vld [vmem:[%s1] sm:$0xff]
    %v355 = vld [vmem:[%s1 + $0x8] sm:$0xff]
    %v356 = vld [vmem:[%s1 + $0x10] sm:$0xff]
    %v357 = vld [vmem:[%s1 + $0x18] sm:$0xff]
    %v358 = vld [vmem:[%s1 + $0x20] sm:$0xff]
    %v359 = vld [vmem:[%s1 + $0x28] sm:$0xff]
    %v360 = vld [vmem:[%s1 + $0x30] sm:$0xff]
    %v361 = vld [vmem:[%s1 + $0x38] sm:$0xff]
    %v362 = vld [vmem:[%s1 + $0x40] sm:$0xff]
    %v363 = vld [vmem:[%s1 + $0x48] sm:$0xff]
    %v364 = vld [vmem:[%s1 + $0x50] sm:$0xff]
    %v365 = vld [vmem:[%s1 + $0x58] sm:$0xff]
    %v366 = vld [vmem:[%s1 + $0x60] sm:$0xff]
    %v367 = vld [vmem:[%s1 + $0x68] sm:$0xff]
    %v368 = vld [vmem:[%s1 + $0x70] sm:$0xff]
    %v369 = vld [vmem:[%s1 + $0x78] sm:$0xff]
    %v370 = vld [vmem:[%s1 + $0x80] sm:$0xff]
    %v371 = vld [vmem:[%s1 + $0x88] sm:$0xff]
    %v372 = vld [vmem:[%s1 + $0x90] sm:$0xff]
    %v373 = vld [vmem:[%s1 + $0x98] sm:$0xff]
    %v374 = vld [vmem:[%s1 + $0xa0] sm:$0xff]
    %v375 = vld [vmem:[%s1 + $0xa8] sm:$0xff]
    %v376 = vld [vmem:[%s1 + $0xb0] sm:$0xff]
    %v377 = vld [vmem:[%s1 + $0xb8] sm:$0xff]
    %v378 = vld [vmem:[%s1 + $0xc0] sm:$0xff]
    %v379 = vld [vmem:[%s1 + $0xc8] sm:$0xff]
    %v380 = vld [vmem:[%s1 + $0xd0] sm:$0xff]
    %v381 = vld [vmem:[%s1 + $0xd8] sm:$0xff]
    %v382 = vld [vmem:[%s1 + $0xe0] sm:$0xff]
    %v383 = vld [vmem:[%s1 + $0xe8] sm:$0xff]
    %v384 = vld [vmem:[%s1 + $0xf0] sm:$0xff]
    %v385 = vld [vmem:[%s1 + $0xf8] sm:$0xff]
    %v386 = vld [vmem:[%s4] sm:$0x3]
    %388 = vset.pattern.permute.xlu0 0
    %389 = vperm.xlu0 %388, %v354
    %v390 = vpop.permute.xlu0 %389
    %393 = vset.pattern.permute.xlu0 0
    %394 = vperm.xlu0 %393, %v355
    %v395 = vpop.permute.xlu0 %394
    %398 = vset.pattern.permute.xlu0 0
    %399 = vperm.xlu0 %398, %v356
    %v400 = vpop.permute.xlu0 %399
    %403 = vset.pattern.permute.xlu0 0
    %404 = vperm.xlu0 %403, %v357
    %v405 = vpop.permute.xlu0 %404
    %408 = vset.pattern.permute.xlu0 0
    %409 = vperm.xlu0 %408, %v358
    %v410 = vpop.permute.xlu0 %409
    %413 = vset.pattern.permute.xlu0 0
    %414 = vperm.xlu0 %413, %v359
    %v415 = vpop.permute.xlu0 %414
    %418 = vset.pattern.permute.xlu0 0
    %419 = vperm.xlu0 %418, %v360
    %v420 = vpop.permute.xlu0 %419
    %423 = vset.pattern.permute.xlu0 0
    %424 = vperm.xlu0 %423, %v361
    %v425 = vpop.permute.xlu0 %424
    %428 = vset.pattern.permute.xlu0 0
    %429 = vperm.xlu0 %428, %v362
    %v430 = vpop.permute.xlu0 %429
    %433 = vset.pattern.permute.xlu0 0
    %434 = vperm.xlu0 %433, %v363
    %v435 = vpop.permute.xlu0 %434
    %438 = vset.pattern.permute.xlu0 0
    %439 = vperm.xlu0 %438, %v364
    %v440 = vpop.permute.xlu0 %439
    %443 = vset.pattern.permute.xlu0 0
    %444 = vperm.xlu0 %443, %v365
    %v445 = vpop.permute.xlu0 %444
    %448 = vset.pattern.permute.xlu0 0
    %449 = vperm.xlu0 %448, %v366
    %v450 = vpop.permute.xlu0 %449
    %453 = vset.pattern.permute.xlu0 0
    %454 = vperm.xlu0 %453, %v367
    %v455 = vpop.permute.xlu0 %454
    %458 = vset.pattern.permute.xlu0 0
    %459 = vperm.xlu0 %458, %v368
    %v460 = vpop.permute.xlu0 %459
    %463 = vset.pattern.permute.xlu0 0
    %464 = vperm.xlu0 %463, %v369
    %v465 = vpop.permute.xlu0 %464
    %468 = vset.pattern.permute.xlu0 0
    %469 = vperm.xlu0 %468, %v370
    %v470 = vpop.permute.xlu0 %469
    %473 = vset.pattern.permute.xlu0 0
    %474 = vperm.xlu0 %473, %v371
    %v475 = vpop.permute.xlu0 %474
    %478 = vset.pattern.permute.xlu0 0
    %479 = vperm.xlu0 %478, %v372
    %v480 = vpop.permute.xlu0 %479
    %483 = vset.pattern.permute.xlu0 0
    %484 = vperm.xlu0 %483, %v373
    %v485 = vpop.permute.xlu0 %484
    %488 = vset.pattern.permute.xlu0 0
    %489 = vperm.xlu0 %488, %v374
    %v490 = vpop.permute.xlu0 %489
    %493 = vset.pattern.permute.xlu0 0
    %494 = vperm.xlu0 %493, %v375
    %v495 = vpop.permute.xlu0 %494
    %498 = vset.pattern.permute.xlu0 0
    %499 = vperm.xlu0 %498, %v376
    %v500 = vpop.permute.xlu0 %499
    %503 = vset.pattern.permute.xlu0 0
    %504 = vperm.xlu0 %503, %v377
    %v505 = vpop.permute.xlu0 %504
    %508 = vset.pattern.permute.xlu0 0
    %509 = vperm.xlu0 %508, %v378
    %v510 = vpop.permute.xlu0 %509
    %513 = vset.pattern.permute.xlu0 0
    %514 = vperm.xlu0 %513, %v379
    %v515 = vpop.permute.xlu0 %514
    %518 = vset.pattern.permute.xlu0 0
    %519 = vperm.xlu0 %518, %v380
    %v520 = vpop.permute.xlu0 %519
    %523 = vset.pattern.permute.xlu0 0
    %524 = vperm.xlu0 %523, %v381
    %v525 = vpop.permute.xlu0 %524
    %528 = vset.pattern.permute.xlu0 0
    %529 = vperm.xlu0 %528, %v382
    %v530 = vpop.permute.xlu0 %529
    %533 = vset.pattern.permute.xlu0 0
    %534 = vperm.xlu0 %533, %v383
    %v535 = vpop.permute.xlu0 %534
    %538 = vset.pattern.permute.xlu0 0
    %539 = vperm.xlu0 %538, %v384
    %v540 = vpop.permute.xlu0 %539
    %543 = vset.pattern.permute.xlu0 0
    %544 = vperm.xlu0 %543, %v385
    %v545 = vpop.permute.xlu0 %544
    %v548 = vlaneseq
    %v549 = vshrl.u32 %v548, 7
    %v550 = vsub.s32 0, %v549
    %v551 = vrot.slane %v386, %v550
    %v552 = vlaneseq
    %v553 = vshrl.u32 %v552, 7
    %v554 = vsub.s32 1, %v553
    %v555 = vrot.slane %v386, %v554
    %v558 = vmul.f32 %v390, %v551
    %v559 = vmul.f32 %v390, %v555
    %v560 = vmul.f32 %v395, %v551
    %v561 = vmul.f32 %v395, %v555
    %v562 = vmul.f32 %v400, %v551
    %v563 = vmul.f32 %v400, %v555
    %v564 = vmul.f32 %v405, %v551
    %v565 = vmul.f32 %v405, %v555
    %v566 = vmul.f32 %v410, %v551
    %v567 = vmul.f32 %v410, %v555
    %v568 = vmul.f32 %v415, %v551
    %v569 = vmul.f32 %v415, %v555
    %v570 = vmul.f32 %v420, %v551
    %v571 = vmul.f32 %v420, %v555
    %v572 = vmul.f32 %v425, %v551
    %v573 = vmul.f32 %v425, %v555
    %v574 = vmul.f32 %v430, %v551
    %v575 = vmul.f32 %v430, %v555
    %v576 = vmul.f32 %v435, %v551
    %v577 = vmul.f32 %v435, %v555
    %v578 = vmul.f32 %v440, %v551
    %v579 = vmul.f32 %v440, %v555
    %v580 = vmul.f32 %v445, %v551
    %v581 = vmul.f32 %v445, %v555
    %v582 = vmul.f32 %v450, %v551
    %v583 = vmul.f32 %v450, %v555
    %v584 = vmul.f32 %v455, %v551
    %v585 = vmul.f32 %v455, %v555
    %v586 = vmul.f32 %v460, %v551
    %v587 = vmul.f32 %v460, %v555
    %v588 = vmul.f32 %v465, %v551
    %v589 = vmul.f32 %v465, %v555
    %v590 = vmul.f32 %v470, %v551
    %v591 = vmul.f32 %v470, %v555
    %v592 = vmul.f32 %v475, %v551
    %v593 = vmul.f32 %v475, %v555
    %v594 = vmul.f32 %v480, %v551
    %v595 = vmul.f32 %v480, %v555
    %v596 = vmul.f32 %v485, %v551
    %v597 = vmul.f32 %v485, %v555
    %v598 = vmul.f32 %v490, %v551
    %v599 = vmul.f32 %v490, %v555
    %v600 = vmul.f32 %v495, %v551
    %v601 = vmul.f32 %v495, %v555
    %v602 = vmul.f32 %v500, %v551
    %v603 = vmul.f32 %v500, %v555
    %v604 = vmul.f32 %v505, %v551
    %v605 = vmul.f32 %v505, %v555
    %v606 = vmul.f32 %v510, %v551
    %v607 = vmul.f32 %v510, %v555
    %v608 = vmul.f32 %v515, %v551
    %v609 = vmul.f32 %v515, %v555
    %v610 = vmul.f32 %v520, %v551
    %v611 = vmul.f32 %v520, %v555
    %v612 = vmul.f32 %v525, %v551
    %v613 = vmul.f32 %v525, %v555
    %v614 = vmul.f32 %v530, %v551
    %v615 = vmul.f32 %v530, %v555
    %v616 = vmul.f32 %v535, %v551
    %v617 = vmul.f32 %v535, %v555
    %v618 = vmul.f32 %v540, %v551
    %v619 = vmul.f32 %v540, %v555
    %v620 = vmul.f32 %v545, %v551
    %v621 = vmul.f32 %v545, %v555
    %v623 = vlaneseq
    %v624 = vshrl.u32 %v623, 7
    %v625 = vsub.s32 0, %v624
    %v626 = vrot.slane %v353, %v625
    %v627 = vlaneseq
    %v628 = vshrl.u32 %v627, 7
    %v629 = vsub.s32 1, %v628
    %v630 = vrot.slane %v353, %v629
    %v633 = vsel %vm289, %v626, %v558
    %v634 = vsel %vm290, %v630, %v559
    %v635 = vsel %vm291, %v626, %v560
    %v636 = vsel %vm292, %v630, %v561
    %v637 = vsel %vm293, %v626, %v562
    %v638 = vsel %vm294, %v630, %v563
    %v639 = vsel %vm295, %v626, %v564
    %v640 = vsel %vm296, %v630, %v565
    %v641 = vsel %vm297, %v626, %v566
    %v642 = vsel %vm298, %v630, %v567
    %v643 = vsel %vm299, %v626, %v568
    %v644 = vsel %vm300, %v630, %v569
    %v645 = vsel %vm301, %v626, %v570
    %v646 = vsel %vm302, %v630, %v571
    %v647 = vsel %vm303, %v626, %v572
    %v648 = vsel %vm304, %v630, %v573
    %v649 = vsel %vm305, %v626, %v574
    %v650 = vsel %vm306, %v630, %v575
    %v651 = vsel %vm307, %v626, %v576
    %v652 = vsel %vm308, %v630, %v577
    %v653 = vsel %vm309, %v626, %v578
    %v654 = vsel %vm310, %v630, %v579
    %v655 = vsel %vm311, %v626, %v580
    %v656 = vsel %vm312, %v630, %v581
    %v657 = vsel %vm313, %v626, %v582
    %v658 = vsel %vm314, %v630, %v583
    %v659 = vsel %vm315, %v626, %v584
    %v660 = vsel %vm316, %v630, %v585
    %v661 = vsel %vm317, %v626, %v586
    %v662 = vsel %vm318, %v630, %v587
    %v663 = vsel %vm319, %v626, %v588
    %v664 = vsel %vm320, %v630, %v589
    %v665 = vsel %vm321, %v626, %v590
    %v666 = vsel %vm322, %v630, %v591
    %v667 = vsel %vm323, %v626, %v592
    %v668 = vsel %vm324, %v630, %v593
    %v669 = vsel %vm325, %v626, %v594
    %v670 = vsel %vm326, %v630, %v595
    %v671 = vsel %vm327, %v626, %v596
    %v672 = vsel %vm328, %v630, %v597
    %v673 = vsel %vm329, %v626, %v598
    %v674 = vsel %vm330, %v630, %v599
    %v675 = vsel %vm331, %v626, %v600
    %v676 = vsel %vm332, %v630, %v601
    %v677 = vsel %vm333, %v626, %v602
    %v678 = vsel %vm334, %v630, %v603
    %v679 = vsel %vm335, %v626, %v604
    %v680 = vsel %vm336, %v630, %v605
    %v681 = vsel %vm337, %v626, %v606
    %v682 = vsel %vm338, %v630, %v607
    %v683 = vsel %vm339, %v626, %v608
    %v684 = vsel %vm340, %v630, %v609
    %v685 = vsel %vm341, %v626, %v610
    %v686 = vsel %vm342, %v630, %v611
    %v687 = vsel %vm343, %v626, %v612
    %v688 = vsel %vm344, %v630, %v613
    %v689 = vsel %vm345, %v626, %v614
    %v690 = vsel %vm346, %v630, %v615
    %v691 = vsel %vm347, %v626, %v616
    %v692 = vsel %vm348, %v630, %v617
    %v693 = vsel %vm349, %v626, %v618
    %v694 = vsel %vm350, %v630, %v619
    %v695 = vsel %vm351, %v626, %v620
    %v696 = vsel %vm352, %v630, %v621
    %v697 = vadd.f32 %v633, %v634
    %698 = vadd.xlane.f32.xlu0 %v697
    %v699 = vpop.xlane.xlu0 %698
    %v700 = vadd.f32 %v635, %v636
    %701 = vadd.xlane.f32.xlu0 %v700
    %v702 = vpop.xlane.xlu0 %701
    %v703 = vadd.f32 %v637, %v638
    %704 = vadd.xlane.f32.xlu0 %v703
    %v705 = vpop.xlane.xlu0 %704
    %v706 = vadd.f32 %v639, %v640
    %707 = vadd.xlane.f32.xlu0 %v706
    %v708 = vpop.xlane.xlu0 %707
    %v709 = vadd.f32 %v641, %v642
    %710 = vadd.xlane.f32.xlu0 %v709
    %v711 = vpop.xlane.xlu0 %710
    %v712 = vadd.f32 %v643, %v644
    %713 = vadd.xlane.f32.xlu0 %v712
    %v714 = vpop.xlane.xlu0 %713
    %v715 = vadd.f32 %v645, %v646
    %716 = vadd.xlane.f32.xlu0 %v715
    %v717 = vpop.xlane.xlu0 %716
    %v718 = vadd.f32 %v647, %v648
    %719 = vadd.xlane.f32.xlu0 %v718
    %v720 = vpop.xlane.xlu0 %719
    %v721 = vadd.f32 %v649, %v650
    %722 = vadd.xlane.f32.xlu0 %v721
    %v723 = vpop.xlane.xlu0 %722
    %v724 = vadd.f32 %v651, %v652
    %725 = vadd.xlane.f32.xlu0 %v724
    %v726 = vpop.xlane.xlu0 %725
    %v727 = vadd.f32 %v653, %v654
    %728 = vadd.xlane.f32.xlu0 %v727
    %v729 = vpop.xlane.xlu0 %728
    %v730 = vadd.f32 %v655, %v656
    %731 = vadd.xlane.f32.xlu0 %v730
    %v732 = vpop.xlane.xlu0 %731
    %v733 = vadd.f32 %v657, %v658
    %734 = vadd.xlane.f32.xlu0 %v733
    %v735 = vpop.xlane.xlu0 %734
    %v736 = vadd.f32 %v659, %v660
    %737 = vadd.xlane.f32.xlu0 %v736
    %v738 = vpop.xlane.xlu0 %737
    %v739 = vadd.f32 %v661, %v662
    %740 = vadd.xlane.f32.xlu0 %v739
    %v741 = vpop.xlane.xlu0 %740
    %v742 = vadd.f32 %v663, %v664
    %743 = vadd.xlane.f32.xlu0 %v742
    %v744 = vpop.xlane.xlu0 %743
    %v745 = vadd.f32 %v665, %v666
    %746 = vadd.xlane.f32.xlu0 %v745
    %v747 = vpop.xlane.xlu0 %746
    %v748 = vadd.f32 %v667, %v668
    %749 = vadd.xlane.f32.xlu0 %v748
    %v750 = vpop.xlane.xlu0 %749
    %v751 = vadd.f32 %v669, %v670
    %752 = vadd.xlane.f32.xlu0 %v751
    %v753 = vpop.xlane.xlu0 %752
    %v754 = vadd.f32 %v671, %v672
    %755 = vadd.xlane.f32.xlu0 %v754
    %v756 = vpop.xlane.xlu0 %755
    %v757 = vadd.f32 %v673, %v674
    %758 = vadd.xlane.f32.xlu0 %v757
    %v759 = vpop.xlane.xlu0 %758
    %v760 = vadd.f32 %v675, %v676
    %761 = vadd.xlane.f32.xlu0 %v760
    %v762 = vpop.xlane.xlu0 %761
    %v763 = vadd.f32 %v677, %v678
    %764 = vadd.xlane.f32.xlu0 %v763
    %v765 = vpop.xlane.xlu0 %764
    %v766 = vadd.f32 %v679, %v680
    %767 = vadd.xlane.f32.xlu0 %v766
    %v768 = vpop.xlane.xlu0 %767
    %v769 = vadd.f32 %v681, %v682
    %770 = vadd.xlane.f32.xlu0 %v769
    %v771 = vpop.xlane.xlu0 %770
    %v772 = vadd.f32 %v683, %v684
    %773 = vadd.xlane.f32.xlu0 %v772
    %v774 = vpop.xlane.xlu0 %773
    %v775 = vadd.f32 %v685, %v686
    %776 = vadd.xlane.f32.xlu0 %v775
    %v777 = vpop.xlane.xlu0 %776
    %v778 = vadd.f32 %v687, %v688
    %779 = vadd.xlane.f32.xlu0 %v778
    %v780 = vpop.xlane.xlu0 %779
    %v781 = vadd.f32 %v689, %v690
    %782 = vadd.xlane.f32.xlu0 %v781
    %v783 = vpop.xlane.xlu0 %782
    %v784 = vadd.f32 %v691, %v692
    %785 = vadd.xlane.f32.xlu0 %v784
    %v786 = vpop.xlane.xlu0 %785
    %v787 = vadd.f32 %v693, %v694
    %788 = vadd.xlane.f32.xlu0 %v787
    %v789 = vpop.xlane.xlu0 %788
    %v790 = vadd.f32 %v695, %v696
    %791 = vadd.xlane.f32.xlu0 %v790
    %v792 = vpop.xlane.xlu0 %791
    %v793 = vrcp.pop %v699
    %v794 = vrcp.pop %v702
    %v795 = vrcp.pop %v705
    %v796 = vrcp.pop %v708
    %v797 = vrcp.pop %v711
    %v798 = vrcp.pop %v714
    %v799 = vrcp.pop %v717
    %v800 = vrcp.pop %v720
    %v801 = vrcp.pop %v723
    %v802 = vrcp.pop %v726
    %v803 = vrcp.pop %v729
    %v804 = vrcp.pop %v732
    %v805 = vrcp.pop %v735
    %v806 = vrcp.pop %v738
    %v807 = vrcp.pop %v741
    %v808 = vrcp.pop %v744
    %v809 = vrcp.pop %v747
    %v810 = vrcp.pop %v750
    %v811 = vrcp.pop %v753
    %v812 = vrcp.pop %v756
    %v813 = vrcp.pop %v759
    %v814 = vrcp.pop %v762
    %v815 = vrcp.pop %v765
    %v816 = vrcp.pop %v768
    %v817 = vrcp.pop %v771
    %v818 = vrcp.pop %v774
    %v819 = vrcp.pop %v777
    %v820 = vrcp.pop %v780
    %v821 = vrcp.pop %v783
    %v822 = vrcp.pop %v786
    %v823 = vrcp.pop %v789
    %v824 = vrcp.pop %v792
    %v825 = vmul.f32 %v633, %v793
    %v826 = vmul.f32 %v634, %v793
    %v827 = vmul.f32 %v635, %v794
    %v828 = vmul.f32 %v636, %v794
    %v829 = vmul.f32 %v637, %v795
    %v830 = vmul.f32 %v638, %v795
    %v831 = vmul.f32 %v639, %v796
    %v832 = vmul.f32 %v640, %v796
    %v833 = vmul.f32 %v641, %v797
    %v834 = vmul.f32 %v642, %v797
    %v835 = vmul.f32 %v643, %v798
    %v836 = vmul.f32 %v644, %v798
    %v837 = vmul.f32 %v645, %v799
    %v838 = vmul.f32 %v646, %v799
    %v839 = vmul.f32 %v647, %v800
    %v840 = vmul.f32 %v648, %v800
    %v841 = vmul.f32 %v649, %v801
    %v842 = vmul.f32 %v650, %v801
    %v843 = vmul.f32 %v651, %v802
    %v844 = vmul.f32 %v652, %v802
    %v845 = vmul.f32 %v653, %v803
    %v846 = vmul.f32 %v654, %v803
    %v847 = vmul.f32 %v655, %v804
    %v848 = vmul.f32 %v656, %v804
    %v849 = vmul.f32 %v657, %v805
    %v850 = vmul.f32 %v658, %v805
    %v851 = vmul.f32 %v659, %v806
    %v852 = vmul.f32 %v660, %v806
    %v853 = vmul.f32 %v661, %v807
    %v854 = vmul.f32 %v662, %v807
    %v855 = vmul.f32 %v663, %v808
    %v856 = vmul.f32 %v664, %v808
    %v857 = vmul.f32 %v665, %v809
    %v858 = vmul.f32 %v666, %v809
    %v859 = vmul.f32 %v667, %v810
    %v860 = vmul.f32 %v668, %v810
    %v861 = vmul.f32 %v669, %v811
    %v862 = vmul.f32 %v670, %v811
    %v863 = vmul.f32 %v671, %v812
    %v864 = vmul.f32 %v672, %v812
    %v865 = vmul.f32 %v673, %v813
    %v866 = vmul.f32 %v674, %v813
    %v867 = vmul.f32 %v675, %v814
    %v868 = vmul.f32 %v676, %v814
    %v869 = vmul.f32 %v677, %v815
    %v870 = vmul.f32 %v678, %v815
    %v871 = vmul.f32 %v679, %v816
    %v872 = vmul.f32 %v680, %v816
    %v873 = vmul.f32 %v681, %v817
    %v874 = vmul.f32 %v682, %v817
    %v875 = vmul.f32 %v683, %v818
    %v876 = vmul.f32 %v684, %v818
    %v877 = vmul.f32 %v685, %v819
    %v878 = vmul.f32 %v686, %v819
    %v879 = vmul.f32 %v687, %v820
    %v880 = vmul.f32 %v688, %v820
    %v881 = vmul.f32 %v689, %v821
    %v882 = vmul.f32 %v690, %v821
    %v883 = vmul.f32 %v691, %v822
    %v884 = vmul.f32 %v692, %v822
    %v885 = vmul.f32 %v693, %v823
    %v886 = vmul.f32 %v694, %v823
    %v887 = vmul.f32 %v695, %v824
    %v888 = vmul.f32 %v696, %v824
    %889 = vst [vmem:[#allocation2] sm:$0xff] %v825
    %890 = vst [vmem:[#allocation2 + $0x8] sm:$0xff] %v826
    %891 = vst [vmem:[#allocation2 + $0x10] sm:$0xff] %v827
    %892 = vst [vmem:[#allocation2 + $0x18] sm:$0xff] %v828
    %893 = vst [vmem:[#allocation2 + $0x20] sm:$0xff] %v829
    %894 = vst [vmem:[#allocation2 + $0x28] sm:$0xff] %v830
    %895 = vst [vmem:[#allocation2 + $0x30] sm:$0xff] %v831
    %896 = vst [vmem:[#allocation2 + $0x38] sm:$0xff] %v832
    %897 = vst [vmem:[#allocation2 + $0x40] sm:$0xff] %v833
    %898 = vst [vmem:[#allocation2 + $0x48] sm:$0xff] %v834
    %899 = vst [vmem:[#allocation2 + $0x50] sm:$0xff] %v835
    %900 = vst [vmem:[#allocation2 + $0x58] sm:$0xff] %v836
    %901 = vst [vmem:[#allocation2 + $0x60] sm:$0xff] %v837
    %902 = vst [vmem:[#allocation2 + $0x68] sm:$0xff] %v838
    %903 = vst [vmem:[#allocation2 + $0x70] sm:$0xff] %v839
    %904 = vst [vmem:[#allocation2 + $0x78] sm:$0xff] %v840
    %905 = vst [vmem:[#allocation2 + $0x80] sm:$0xff] %v841
    %906 = vst [vmem:[#allocation2 + $0x88] sm:$0xff] %v842
    %907 = vst [vmem:[#allocation2 + $0x90] sm:$0xff] %v843
    %908 = vst [vmem:[#allocation2 + $0x98] sm:$0xff] %v844
    %909 = vst [vmem:[#allocation2 + $0xa0] sm:$0xff] %v845
    %910 = vst [vmem:[#allocation2 + $0xa8] sm:$0xff] %v846
    %911 = vst [vmem:[#allocation2 + $0xb0] sm:$0xff] %v847
    %912 = vst [vmem:[#allocation2 + $0xb8] sm:$0xff] %v848
    %913 = vst [vmem:[#allocation2 + $0xc0] sm:$0xff] %v849
    %914 = vst [vmem:[#allocation2 + $0xc8] sm:$0xff] %v850
    %915 = vst [vmem:[#allocation2 + $0xd0] sm:$0xff] %v851
    %916 = vst [vmem:[#allocation2 + $0xd8] sm:$0xff] %v852
    %917 = vst [vmem:[#allocation2 + $0xe0] sm:$0xff] %v853
    %918 = vst [vmem:[#allocation2 + $0xe8] sm:$0xff] %v854
    %919 = vst [vmem:[#allocation2 + $0xf0] sm:$0xff] %v855
    %920 = vst [vmem:[#allocation2 + $0xf8] sm:$0xff] %v856
    %921 = vst [vmem:[#allocation2 + $0x100] sm:$0xff] %v857
    %922 = vst [vmem:[#allocation2 + $0x108] sm:$0xff] %v858
    %923 = vst [vmem:[#allocation2 + $0x110] sm:$0xff] %v859
    %924 = vst [vmem:[#allocation2 + $0x118] sm:$0xff] %v860
    %925 = vst [vmem:[#allocation2 + $0x120] sm:$0xff] %v861
    %926 = vst [vmem:[#allocation2 + $0x128] sm:$0xff] %v862
    %927 = vst [vmem:[#allocation2 + $0x130] sm:$0xff] %v863
    %928 = vst [vmem:[#allocation2 + $0x138] sm:$0xff] %v864
    %929 = vst [vmem:[#allocation2 + $0x140] sm:$0xff] %v865
    %930 = vst [vmem:[#allocation2 + $0x148] sm:$0xff] %v866
    %931 = vst [vmem:[#allocation2 + $0x150] sm:$0xff] %v867
    %932 = vst [vmem:[#allocation2 + $0x158] sm:$0xff] %v868
    %933 = vst [vmem:[#allocation2 + $0x160] sm:$0xff] %v869
    %934 = vst [vmem:[#allocation2 + $0x168] sm:$0xff] %v870
    %935 = vst [vmem:[#allocation2 + $0x170] sm:$0xff] %v871
    %936 = vst [vmem:[#allocation2 + $0x178] sm:$0xff] %v872
    %937 = vst [vmem:[#allocation2 + $0x180] sm:$0xff] %v873
    %938 = vst [vmem:[#allocation2 + $0x188] sm:$0xff] %v874
    %939 = vst [vmem:[#allocation2 + $0x190] sm:$0xff] %v875
    %940 = vst [vmem:[#allocation2 + $0x198] sm:$0xff] %v876
    %941 = vst [vmem:[#allocation2 + $0x1a0] sm:$0xff] %v877
    %942 = vst [vmem:[#allocation2 + $0x1a8] sm:$0xff] %v878
    %943 = vst [vmem:[#allocation2 + $0x1b0] sm:$0xff] %v879
    %944 = vst [vmem:[#allocation2 + $0x1b8] sm:$0xff] %v880
    %945 = vst [vmem:[#allocation2 + $0x1c0] sm:$0xff] %v881
    %946 = vst [vmem:[#allocation2 + $0x1c8] sm:$0xff] %v882
    %947 = vst [vmem:[#allocation2 + $0x1d0] sm:$0xff] %v883
    %948 = vst [vmem:[#allocation2 + $0x1d8] sm:$0xff] %v884
    %949 = vst [vmem:[#allocation2 + $0x1e0] sm:$0xff] %v885
    %950 = vst [vmem:[#allocation2 + $0x1e8] sm:$0xff] %v886
    %951 = vst [vmem:[#allocation2 + $0x1f0] sm:$0xff] %v887
    %952 = vst [vmem:[#allocation2 + $0x1f8] sm:$0xff] %v888
    // Predicated region
    $region22: #{tpu_custom_call.1} parent=1 // pred_check
      _
    $region23: #{tpu_custom_call.1} parent=1 // pred_check_branch
      %954 = sbr.rel (0) target = $region25
    $region24: #{tpu_custom_call.1} parent=1 // pred_region
      %s956 = ssub.s32 8192, 8192
      %957 = vsyncadd [#allocation3], %s956
      %s958 = sshll.u32 [#allocation2], 4
      %s959 = int_to_ptr.vmem [resolvable:$true] %s958
      %964 = dma.vmem_to_hbm [thread:$0]  %s959, 8192, %s5, [#allocation3], 256, 256, 16
    $region25: #{tpu_custom_call.1} parent=1 // pred_fallthru
      _
    // Predicated region
    $region26: #{tpu_custom_call.1} parent=1 // pred_check
      _
    $region27: #{tpu_custom_call.1} parent=1 // pred_check_branch
      %966 = sbr.rel (0) target = $region29
    $region28: #{tpu_custom_call.1} parent=1 // pred_region
      %967 = dma.done [#allocation3], 8192
    $region29: #{tpu_custom_call.1} parent=1 // pred_fallthru
      _
    %968 = vsyncpa [#allocation3], 1

</llo_original>
